<compile_context>
chip_gen: v7x
topology: tpu7x:2x2x1
jax: 0.10.0
libtpu: 0.0.40
codegen_flags: <defaults>
</compile_context>

<pallas_src>
import functools

import jax
import jax.numpy as jnp
from jax import lax
from jax.experimental import pallas as pl
from jax.experimental.pallas import tpu as pltpu

LN_EPS = 1e-5
_LANE = 128


def _round_up(x, m):
    return ((x + m - 1) // m) * m


def _divisors(n):
    out = set()
    i = 1
    while i * i <= n:
        if n % i == 0:
            out.add(i)
            out.add(n // i)
        i += 1
    return sorted(out)


def _vmem_budget_bytes():
    try:
        cap = pltpu.get_tpu_info().vmem_capacity_bytes
    except Exception:
        cap = 64 * 1024 * 1024  # conservative fallback (v7x physical VMEM)
    # Leave headroom for compiler-internal scratch; never ask for more than ~96 MiB.
    return min(int(cap * 3 // 4), 96 * 1024 * 1024)


def _choose_tiles(B, N, Fp, budget, isz):
    """Pick (BT, TM): graphs packed per grid step, adjacency row-tile size."""

    def fits(bt, tm):
        need = (
            2 * bt * tm * N * isz      # adjacency row tile (double-buffered)
            + 2 * bt * N * Fp * isz    # xw block (double-buffered)
            + 2 * bt * tm * Fp * 4     # f32 output tile (double-buffered)
            + 2 * 3 * Fp * 4           # params
        )
        return need <= budget

    if N <= 512:
        # Small graphs: keep full rows; pack as many graphs per step as the
        # VMEM budget allows (amortizes the ~0.35 us per-step overhead), while
        # keeping >= 2 grid steps so both v7x TensorCores get work.
        divs = sorted(_divisors(B), reverse=True)
        preferred = [d for d in divs if B // d >= 2] or divs
        for bt in preferred:
            if fits(bt, N):
                return bt, N
        return 1, N

    # Large graphs: one graph per step, row-tile the adjacency.
    cands = [d for d in _divisors(N) if d % 8 == 0 and d <= 1024] or [N]
    for tm in sorted(cands, reverse=True):
        if fits(1, tm):
            return 1, tm
    return 1, min(cands)  # best effort


def _gcn_ln_relu_kernel(adj_ref, xw_ref, params_ref, out_ref, *, bt, f_out):
    # adj_ref:    (BT, TM, N)   adjacency row tile (matmul dtype, e.g. bf16)
    # xw_ref:     (BT, N, Fp)   precomputed x @ W per graph (matmul dtype)
    # params_ref: (3, Fp)       [bias; gamma; beta] (f32, zero-padded features)
    # out_ref:    (BT, TM, Fp)  f32 output tile
    bias = params_ref[0:1, :]
    gamma = params_ref[1:2, :]
    beta = params_ref[2:3, :]
    inv_f = 1.0 / float(f_out)

    tm, fp = out_ref.shape[1], out_ref.shape[2]
    if fp != f_out:
        # Mask for the padded feature columns (hoisted out of the batch loop).
        col = lax.broadcasted_iota(jnp.int32, (tm, fp), 1)
        valid = (col < f_out).astype(jnp.float32)
    else:
        valid = None

    def body(b, carry):
        # Graph-convolution row tile: adj_tile @ xw + bias (MXU, f32 accumulation).
        h = jnp.dot(adj_ref[b], xw_ref[b],
                    preferred_element_type=jnp.float32) + bias

        # LayerNorm over the real F_out features (two-pass: mean, then centered
        # sum of squares).  Padded columns of h are exactly zero (zero-padded W
        # and bias), so the mean is exact; the mask keeps them out of the var.
        mean = jnp.sum(h, axis=-1, keepdims=True) * inv_f
        d = h - mean
        if valid is not None:
            d = d * valid
        var = jnp.sum(d * d, axis=-1, keepdims=True) * inv_f
        scale = lax.rsqrt(var + LN_EPS) * gamma   # gamma folded into rsqrt scale (EUP)

        # ReLU; dropout is eval-mode identity.
        out_ref[b] = jnp.maximum(d * scale + beta, 0.0)
        return carry

    if bt <= 4:
        for b in range(bt):          # fully unrolled for small BT
            body(b, 0)
    else:
        lax.fori_loop(0, bt, body, 0)   # bounds live ranges for large BT


def gc_norm_relu_drop(adjacency, x, weight, bias, gamma, beta,
                      matmul_dtype=jnp.bfloat16):
    """adjacency: [B, N, N], x: [B, N, F_in]  ->  [B, N, F_out] (float32)."""
    B, N, F_in = x.shape
    F_out = weight.shape[1]
    Fp = _round_up(F_out, _LANE)           # lane-dense feature dim
    pad = Fp - F_out

    w_p = jnp.pad(weight.astype(jnp.float32), ((0, 0), (0, pad)))

    # Feature projection hoisted out of the kernel: f32 XLA matmul, streamed to
    # the kernel in the (narrower) matmul dtype.  Padded columns are exactly 0.
    xw = (x.astype(jnp.float32) @ w_p).astype(matmul_dtype)
    adj = adjacency.astype(matmul_dtype)

    params = jnp.stack([
        jnp.pad(bias.astype(jnp.float32), (0, pad)),
        jnp.pad(gamma.astype(jnp.float32), (0, pad)),
        jnp.pad(beta.astype(jnp.float32), (0, pad)),
    ])                                      # (3, Fp)

    isz = jnp.dtype(matmul_dtype).itemsize
    budget = _vmem_budget_bytes()
    BT, TM = _choose_tiles(B, N, Fp, budget, isz)

    kernel = functools.partial(_gcn_ln_relu_kernel, bt=BT, f_out=F_out)

    cost = pl.CostEstimate(
        flops=2 * B * N * N * Fp + 10 * B * N * Fp,
        transcendentals=B * N,
        bytes_accessed=(B * N * N * isz + B * N * Fp * isz
                        + 3 * Fp * 4 + B * N * Fp * 4),
    )

    out_padded = pl.pallas_call(
        kernel,
        out_shape=jax.ShapeDtypeStruct((B, N, Fp), jnp.float32),
        grid_spec=pltpu.PrefetchScalarGridSpec(
            num_scalar_prefetch=0,
            grid=(B // BT, N // TM),
            in_specs=[
                pl.BlockSpec((BT, TM, N), lambda bi, mi: (bi, mi, 0)),
                pl.BlockSpec((BT, N, Fp), lambda bi, mi: (bi, 0, 0)),
                pl.BlockSpec((3, Fp), lambda bi, mi: (0, 0)),
            ],
            out_specs=pl.BlockSpec((BT, TM, Fp), lambda bi, mi: (bi, mi, 0)),
        ),
        compiler_params=pltpu.CompilerParams(
            # No cross-iteration carry remains (x@W is hoisted), so both grid
            # axes are parallel -> megacore even when B // BT == 1.
            dimension_semantics=("parallel", "parallel"),
            vmem_limit_bytes=budget,
        ),
        cost_estimate=cost,
    )(adj, xw, params)

    return out_padded[:, :, :F_out]


def _reference(adjacency, x, weight, bias, gamma, beta):
    h = jnp.einsum("bnk,bkf->bnf", adjacency, x @ weight) + bias
    mean = jnp.mean(h, axis=-1, keepdims=True)
    var = jnp.mean((h - mean) ** 2, axis=-1, keepdims=True)
    h = (h - mean) * lax.rsqrt(var + LN_EPS) * gamma + beta
    return jnp.maximum(h, 0.0)


if __name__ == "__main__":
    B, N = 2, 8
    F_in, F_out = 16, 32

    key = jax.random.PRNGKey(0)
    k_adj, k_x, k_w, k_b = jax.random.split(key, 4)

    adjacency = jax.random.uniform(k_adj, (B, N, N), dtype=jnp.float32)
    x = jax.random.normal(k_x, (B, N, F_in), dtype=jnp.float32)

    # Deterministic parameter init (shapes from GraphConvolution / LayerNorm __init__)
    weight = jax.random.normal(k_w, (F_in, F_out), dtype=jnp.float32) * 0.1
    bias = jax.random.normal(k_b, (F_out,), dtype=jnp.float32) * 0.1
    gamma = jnp.ones((F_out,), dtype=jnp.float32)
    beta = jnp.zeros((F_out,), dtype=jnp.float32)

    ref = _reference(adjacency, x, weight, bias, gamma, beta)

    # f32 MXU path: tight check against the f32 reference.
    out_f32 = jax.block_until_ready(
        gc_norm_relu_drop(adjacency, x, weight, bias, gamma, beta,
                          matmul_dtype=jnp.float32))
    assert out_f32.shape == (B, N, F_out)
    assert jnp.allclose(out_f32, ref, atol=1e-4, rtol=1e-4)

    # Default bf16-streaming path (the performance configuration): looser check.
    out_bf16 = jax.block_until_ready(
        gc_norm_relu_drop(adjacency, x, weight, bias, gamma, beta))
    assert out_bf16.shape == (B, N, F_out)
    assert jnp.allclose(out_bf16, ref, atol=5e-2, rtol=5e-2)

    print("KERNEL_OK")
</pallas_src>

<mosaic_0001>
module attributes {stable_mosaic.version = 11 : i64} {
  func.func @_gcn_ln_relu_kernel(%arg0: i32, %arg1: i32, %arg2: memref<1x8x8xf32, #tpu.memory_space<vmem>>, %arg3: memref<1x8x128xf32, #tpu.memory_space<vmem>>, %arg4: memref<3x128xf32, #tpu.memory_space<vmem>>, %arg5: memref<1x8x128xf32, #tpu.memory_space<vmem>>) attributes {dimension_semantics = [#tpu.dimension_semantics<parallel>, #tpu.dimension_semantics<parallel>], iteration_bounds = array<i64: 2, 1>, scalar_prefetch = 0 : i64, scratch_operands = 0 : i64, tpu.core_type = #tpu.core_type<tc>, window_params = [{transform_indices = @transform_0, window_bounds = array<i64: 1, 8, 8>}, {transform_indices = @transform_1, window_bounds = array<i64: 1, 8, 128>}, {pipeline_mode = #tpu.pipeline_mode<synchronous>, transform_indices = @transform_2, window_bounds = array<i64: 3, 128>}, {transform_indices = @transform_3, window_bounds = array<i64: 1, 8, 128>}]} {
    %c0 = arith.constant 0 : index
    %c0_0 = arith.constant 0 : index
    %0 = vector.load %arg4[%c0, %c0_0] : memref<3x128xf32, #tpu.memory_space<vmem>>, vector<1x128xf32>
    %c1 = arith.constant 1 : index
    %c0_1 = arith.constant 0 : index
    %1 = vector.load %arg4[%c1, %c0_1] : memref<3x128xf32, #tpu.memory_space<vmem>>, vector<1x128xf32>
    %c2 = arith.constant 2 : index
    %c0_2 = arith.constant 0 : index
    %2 = vector.load %arg4[%c2, %c0_2] : memref<3x128xf32, #tpu.memory_space<vmem>>, vector<1x128xf32>
    %3 = tpu.iota {dimensions = array<i32: 1>} : vector<8x128xi32>
    %c32_i32 = arith.constant 32 : i32
    %4 = vector.broadcast %c32_i32 : i32 to vector<8x128xi32>
    %5 = arith.cmpi slt, %3, %4 : vector<8x128xi32>
    %6 = arith.extui %5 : vector<8x128xi1> to vector<8x128xi32>
    %7 = arith.sitofp %6 : vector<8x128xi32> to vector<8x128xf32>
    %c0_3 = arith.constant 0 : index
    %c0_4 = arith.constant 0 : index
    %c0_5 = arith.constant 0 : index
    %8 = vector.load %arg2[%c0_3, %c0_4, %c0_5] : memref<1x8x8xf32, #tpu.memory_space<vmem>>, vector<1x8x8xf32>
    %9 = vector.shape_cast %8 : vector<1x8x8xf32> to vector<8x8xf32>
    %c0_6 = arith.constant 0 : index
    %c0_7 = arith.constant 0 : index
    %c0_8 = arith.constant 0 : index
    %10 = vector.load %arg3[%c0_6, %c0_7, %c0_8] : memref<1x8x128xf32, #tpu.memory_space<vmem>>, vector<1x8x128xf32>
    %11 = vector.shape_cast %10 : vector<1x8x128xf32> to vector<8x128xf32>
    %cst = arith.constant dense<0.000000e+00> : vector<8x128xf32>
    %12 = tpu.matmul %9, %11, %cst {dimension_numbers = #tpu.dot_dimension_numbers<[1], [0], [0], [1], [0, 0, 1, 1], [], []>} : vector<8x8xf32>, vector<8x128xf32>, vector<8x128xf32> -> vector<8x128xf32>
    %13 = vector.broadcast %0 : vector<1x128xf32> to vector<8x128xf32>
    %14 = arith.addf %12, %13 : vector<8x128xf32>
    %cst_9 = arith.constant dense<0.000000e+00> : vector<8xf32>
    %15 = vector.multi_reduction <add>, %14, %cst_9 [1] : vector<8x128xf32> to vector<8xf32>
    %16 = vector.shape_cast %15 : vector<8xf32> to vector<8x1xf32>
    %cst_10 = arith.constant 3.125000e-02 : f32
    %17 = vector.broadcast %cst_10 : f32 to vector<8x1xf32>
    %18 = arith.mulf %16, %17 : vector<8x1xf32>
    %19 = vector.broadcast %18 : vector<8x1xf32> to vector<8x128xf32>
    %20 = arith.subf %14, %19 : vector<8x128xf32>
    %21 = arith.mulf %20, %7 : vector<8x128xf32>
    %22 = arith.mulf %21, %21 : vector<8x128xf32>
    %cst_11 = arith.constant dense<0.000000e+00> : vector<8xf32>
    %23 = vector.multi_reduction <add>, %22, %cst_11 [1] : vector<8x128xf32> to vector<8xf32>
    %24 = vector.shape_cast %23 : vector<8xf32> to vector<8x1xf32>
    %cst_12 = arith.constant 3.125000e-02 : f32
    %25 = vector.broadcast %cst_12 : f32 to vector<8x1xf32>
    %26 = arith.mulf %24, %25 : vector<8x1xf32>
    %cst_13 = arith.constant 9.99999974E-6 : f32
    %27 = vector.broadcast %cst_13 : f32 to vector<8x1xf32>
    %28 = arith.addf %26, %27 : vector<8x1xf32>
    %29 = math.rsqrt %28 : vector<8x1xf32>
    %30 = vector.broadcast %29 : vector<8x1xf32> to vector<8x128xf32>
    %31 = vector.broadcast %1 : vector<1x128xf32> to vector<8x128xf32>
    %32 = arith.mulf %30, %31 : vector<8x128xf32>
    %33 = arith.mulf %21, %32 : vector<8x128xf32>
    %34 = vector.broadcast %2 : vector<1x128xf32> to vector<8x128xf32>
    %35 = arith.addf %33, %34 : vector<8x128xf32>
    %cst_14 = arith.constant 0.000000e+00 : f32
    %36 = vector.broadcast %cst_14 : f32 to vector<8x128xf32>
    %37 = arith.maximumf %35, %36 : vector<8x128xf32>
    %c0_15 = arith.constant 0 : index
    %c0_16 = arith.constant 0 : index
    %c0_17 = arith.constant 0 : index
    %38 = vector.load %arg5[%c0_15, %c0_16, %c0_17] : memref<1x8x128xf32, #tpu.memory_space<vmem>>, vector<1x8x128xf32>
    %39 = vector.shape_cast %38 : vector<1x8x128xf32> to vector<8x128xf32>
    %40 = vector.shape_cast %37 : vector<8x128xf32> to vector<1x8x128xf32>
    tpu.vector_store %arg5[%c0_15, %c0_16, %c0_17], %40 {strides = array<i32>} : memref<1x8x128xf32, #tpu.memory_space<vmem>>, vector<1x8x128xf32>,
    return
  }
  func.func @transform_0(%arg0: i32, %arg1: i32) -> (i32, i32, i32) {
    %c0_i32 = arith.constant 0 : i32
    %c0_i32_0 = arith.constant 0 : i32
    return %arg0, %arg1, %c0_i32 : i32, i32, i32
  }
  func.func @transform_1(%arg0: i32, %arg1: i32) -> (i32, i32, i32) {
    %c0_i32 = arith.constant 0 : i32
    %c0_i32_0 = arith.constant 0 : i32
    %c0_i32_1 = arith.constant 0 : i32
    return %arg0, %c0_i32, %c0_i32_0 : i32, i32, i32
  }
  func.func @transform_2(%arg0: i32, %arg1: i32) -> (i32, i32) {
    %c0_i32 = arith.constant 0 : i32
    %c0_i32_0 = arith.constant 0 : i32
    %c0_i32_1 = arith.constant 0 : i32
    return %c0_i32, %c0_i32_0 : i32, i32
  }
  func.func @transform_3(%arg0: i32, %arg1: i32) -> (i32, i32, i32) {
    %c0_i32 = arith.constant 0 : i32
    %c0_i32_0 = arith.constant 0 : i32
    return %arg0, %arg1, %c0_i32 : i32, i32, i32
  }
}

</mosaic_0001>

<llo_original>
// kernel: tpu_custom_call.1
$region0: #{tpu_custom_call.1}
  #allocation0 [shape = 'u32[]', space=smem, size = 0x4, offset = 0x4, fixed_abs, tag = 'smem constant byte address 0x4 - core index']
  #allocation1 [shape = 'u32[144,128]{1,0:T(1,128)}', space=vmem, size = 0x12000, scoped, tag = 'internal scratch']
  %s0 = inlined_call_operand.hbm [shape: f32[2,8,8], index: 0, kind: input, shape index: {}]
  %s1 = inlined_call_operand.hbm [shape: f32[2,8,128], index: 1, kind: input, shape index: {}]
  %s2 = inlined_call_operand.vmem [shape: f32[3,128], index: 2, kind: input, shape index: {}]
  %s3 = inlined_call_operand.hbm [shape: f32[2,8,128], index: 3, kind: output, shape index: {}]
  %s4 = sld [smem:[#allocation0]]
  $region53: #{tpu_custom_call.1} parent=0
    _
  %s6 = ssub.s32 1, %s4
  %s7 = scalar_select 0, %s6, %s4
  $region1: #{tpu_custom_call.1} parent=0
    #allocation2 [shape = 'u8[8192]{0}', space=vmem, size = 0x2000, scoped, tag = 'input window, operand 0']
    #allocation3 [shape = 's32[2]{0}', space=sflag, size = 0x8, scoped, tag = 'scoped memory for tpu_custom_call.1']
    #allocation4 [shape = 's32[2]{0}', space=sflag, size = 0x8, scoped, tag = 'scoped memory for tpu_custom_call.1']
    #allocation5 [shape = 'u8[8192]{0}', space=vmem, size = 0x2000, scoped, tag = 'input window, operand 1']
    #allocation6 [shape = 's32[2]{0}', space=sflag, size = 0x8, scoped, tag = 'scoped memory for tpu_custom_call.1']
    #allocation7 [shape = 'u8[8192]{0}', space=vmem, size = 0x2000, scoped, tag = 'output window, operand 0']
    %8 = vsyncpa [#allocation3], 0
    %s9 = scalar_lea.sflag [#allocation3], 1
    %10 = vsyncpa %s9, 0
    %11 = vsyncpa [#allocation6], 0
    %s12 = scalar_lea.sflag [#allocation6], 1
    %13 = vsyncpa %s12, 0
    %14 = vsyncpa [#allocation4], 0
    %s15 = scalar_lea.sflag [#allocation4], 1
    %16 = vsyncpa %s15, 0
    loop: start=0, step=1, limit=4
    $region2: #{tpu_custom_call.1} parent=1 // loop_pre_header
      _
    $region3: #{tpu_custom_call.1} parent=1 // loop_header
      %s18 = sphi 0, %s22
      %p19 = scmp.ge.s32.totalorder %s18, 4
      %s25 = sphi 0, %s37
      %s26 = sphi 0, %s33
      %s27 = sphi 0, %s25
      %s28 = sphi 0, %s26
      %s29 = sphi 0, %s27
      %s30 = sphi 0, %s28
      %s42 = sphi 0, %s44
      %s45 = sphi 0, %s42
      %s46 = sphi 0, %s45
      %s62 = sphi 0, %s46
      %s68 = sphi 0, %s70
      %s71 = sphi 0, %s68
      %s72 = sphi 0, %s71
      %s88 = sphi 0, %s72
      %s92 = sphi 0, %s92
      %s94 = sphi 0, %s92
      %s95 = sphi 0, %s94
      %s109 = sphi 0, %s95
      %s117 = sphi 0, %s119
      %s120 = sphi 0, %s117
      %s121 = sphi 0, %s120
      %s137 = sphi 0, %s121
    $region4: #{tpu_custom_call.1} parent=1 // loop_header_branch
      %21 = sbr.rel (%p19) target = $region8
    $region5: #{tpu_custom_call.1} parent=1 // loop_body
      %s23 = ssub.s32 %s18, 1
      %s24 = ssub.s32 %s18, 2
      %s31 = sadd.s32 1, %s26
      %p32 = scmp.ge.s32.totalorder %s31, 1
      %s33 = scalar_select %p32, 0, %s31
      %s34 = sadd.s32 1, %s25
      %s35 = scalar_select %p32, %s34, %s25
      %p36 = scmp.ge.s32.totalorder %s35, 2
      %s37 = scalar_select %p36, 0, %s35
      %s38 = ssub.s32 %s25, %s37
      %s39 = ssub.s32 %s26, %s33
      %s40 = sor.u32 %s38, %s39
      %p41 = scmp.eq.s32.totalorder %s40, 0
      %s43 = sadd.s32 %s42, 1
      %s44 = scalar_select %p41, %s42, %s43
      %p47 = pneg %p41
      %p48 = scmp.eq.s32.totalorder %s18, 1
      %p49 = por %p47, %p48
      %p50 = scmp.ne.s32.totalorder %s42, %s45
      %p51 = scmp.eq.s32.totalorder %s18, 0
      %p52 = por %p50, %p51
      %p53 = scmp.ne.s32.totalorder %s42, %s45
      %p54 = scmp.eq.s32.totalorder %s23, 1
      %p55 = por %p53, %p54
      %p56 = scmp.ne.s32.totalorder %s45, %s46
      %p57 = scmp.eq.s32.totalorder %s23, 0
      %p58 = por %p56, %p57
      %p59 = scmp.ne.s32.totalorder %s45, %s46
      %p60 = scmp.eq.s32.totalorder %s24, 1
      %p61 = por %p59, %p60
      %p63 = scmp.ne.s32.totalorder %s46, %s62
      %p64 = scmp.eq.s32.totalorder %s24, 0
      %p65 = por %p63, %p64
      %s66 = ssub.s32 %s25, %s37
      %p67 = scmp.eq.s32.totalorder %s66, 0
      %s69 = sadd.s32 %s68, 1
      %s70 = scalar_select %p67, %s68, %s69
      %p73 = pneg %p67
      %p74 = scmp.eq.s32.totalorder %s18, 1
      %p75 = por %p73, %p74
      %p76 = scmp.ne.s32.totalorder %s68, %s71
      %p77 = scmp.eq.s32.totalorder %s18, 0
      %p78 = por %p76, %p77
      %p79 = scmp.ne.s32.totalorder %s68, %s71
      %p80 = scmp.eq.s32.totalorder %s23, 1
      %p81 = por %p79, %p80
      %p82 = scmp.ne.s32.totalorder %s71, %s72
      %p83 = scmp.eq.s32.totalorder %s23, 0
      %p84 = por %p82, %p83
      %p85 = scmp.ne.s32.totalorder %s71, %s72
      %p86 = scmp.eq.s32.totalorder %s24, 1
      %p87 = por %p85, %p86
      %p89 = scmp.ne.s32.totalorder %s72, %s88
      %p90 = scmp.eq.s32.totalorder %s24, 0
      %p91 = por %p89, %p90
      %s93 = sadd.s32 %s92, 1
      %p96 = scmp.eq.s32.totalorder %s18, 1
      %p97 = scmp.ne.s32.totalorder %s92, %s94
      %p98 = scmp.eq.s32.totalorder %s18, 0
      %p99 = por %p97, %p98
      %p100 = scmp.ne.s32.totalorder %s92, %s94
      %p101 = scmp.eq.s32.totalorder %s23, 1
      %p102 = por %p100, %p101
      %p103 = scmp.ne.s32.totalorder %s94, %s95
      %p104 = scmp.eq.s32.totalorder %s23, 0
      %p105 = por %p103, %p104
      %p106 = scmp.ne.s32.totalorder %s94, %s95
      %p107 = scmp.eq.s32.totalorder %s24, 1
      %p108 = por %p106, %p107
      %p110 = scmp.ne.s32.totalorder %s95, %s109
      %p111 = scmp.eq.s32.totalorder %s24, 0
      %p112 = por %p110, %p111
      %s113 = ssub.s32 %s25, %s37
      %s114 = ssub.s32 %s26, %s33
      %s115 = sor.u32 %s113, %s114
      %p116 = scmp.eq.s32.totalorder %s115, 0
      %s118 = sadd.s32 %s117, 1
      %s119 = scalar_select %p116, %s117, %s118
      %p122 = pneg %p116
      %p123 = scmp.eq.s32.totalorder %s18, 1
      %p124 = por %p122, %p123
      %p125 = scmp.ne.s32.totalorder %s117, %s120
      %p126 = scmp.eq.s32.totalorder %s18, 0
      %p127 = por %p125, %p126
      %p128 = scmp.ne.s32.totalorder %s117, %s120
      %p129 = scmp.eq.s32.totalorder %s23, 1
      %p130 = por %p128, %p129
      %p131 = scmp.ne.s32.totalorder %s120, %s121
      %p132 = scmp.eq.s32.totalorder %s23, 0
      %p133 = por %p131, %p132
      %p134 = scmp.ne.s32.totalorder %s120, %s121
      %p135 = scmp.eq.s32.totalorder %s24, 1
      %p136 = por %p134, %p135
      %p138 = scmp.ne.s32.totalorder %s121, %s137
      %p139 = scmp.eq.s32.totalorder %s24, 0
      %p140 = por %p138, %p139
      %p141 = scmp.le.s32.totalorder 1, %s18
      %p142 = scmp.lt.s32.totalorder %s18, 3
      %p143 = pnand %p141, %p142
      %p144 = pneg %p143
      // Predicated region
      $region9: #{tpu_custom_call.1} parent=5 // pred_check
        _
      $region10: #{tpu_custom_call.1} parent=5 // pred_check_branch
        %146 = sbr.rel (%p143) target = $region12
      $region11: #{tpu_custom_call.1} parent=5 // pred_region
        %s147 = ssub.s32 %s18, 1
        // Predicated region
        $region13: #{tpu_custom_call.1} parent=11 // pred_check
          %p148 = pneg %p105
        $region14: #{tpu_custom_call.1} parent=11 // pred_check_branch
          %150 = sbr.rel (%p148) target = $region16
        $region15: #{tpu_custom_call.1} parent=11 // pred_region
          _
        $region16: #{tpu_custom_call.1} parent=11 // pred_fallthru
          _
      $region12: #{tpu_custom_call.1} parent=5 // pred_fallthru
        _
      %p151 = scmp.lt.s32.totalorder %s18, 2
      // Predicated region
      $region17: #{tpu_custom_call.1} parent=5 // pred_check
        %p152 = pneg %p151
      $region18: #{tpu_custom_call.1} parent=5 // pred_check_branch
        %154 = sbr.rel (%p152) target = $region20
      $region19: #{tpu_custom_call.1} parent=5 // pred_region
        // Predicated region
        $region21: #{tpu_custom_call.1} parent=19 // pred_check
          %p155 = pneg %p52
        $region22: #{tpu_custom_call.1} parent=19 // pred_check_branch
          %157 = sbr.rel (%p155) target = $region24
        $region23: #{tpu_custom_call.1} parent=19 // pred_region
          %s158 = sand.u32 %s42, 1
          %s159 = scalar_lea.sflag [#allocation3], %s158
          %s160 = sand.u32 %s42, 1
          %s161 = smul.addr %s160, 8
          %s162 = scalar_lea.vmem [#allocation2], %s161
          %s164 = ssub.s32 128, 128
          %165 = vsyncadd %s159, %s164
          %s166 = sadd.s32 %s26, %s25
          %s167 = smul.addr %s166, 128
          %s168 = scalar_lea.hbm %s0, %s167
          %s170 = sshll.u32 %s162, 4
          %s171 = int_to_ptr.vmem [resolvable:$true] %s170
          %173 = dma.hbm_to_vmem [thread:$0]  %s168, 128, %s171, %s159
        $region24: #{tpu_custom_call.1} parent=19 // pred_fallthru
          _
        // Predicated region
        $region25: #{tpu_custom_call.1} parent=19 // pred_check
          %p174 = pneg %p78
        $region26: #{tpu_custom_call.1} parent=19 // pred_check_branch
          %176 = sbr.rel (%p174) target = $region28
        $region27: #{tpu_custom_call.1} parent=19 // pred_region
          %s177 = sand.u32 %s68, 1
          %s178 = scalar_lea.sflag [#allocation6], %s177
          %s179 = sand.u32 %s68, 1
          %s180 = smul.addr %s179, 8
          %s181 = scalar_lea.vmem [#allocation5], %s180
          %s183 = ssub.s32 128, 128
          %184 = vsyncadd %s178, %s183
          %s185 = smul.addr %s25, 128
          %s186 = scalar_lea.hbm %s1, %s185
          %s188 = sshll.u32 %s181, 4
          %s189 = int_to_ptr.vmem [resolvable:$true] %s188
          %191 = dma.hbm_to_vmem [thread:$0]  %s186, 128, %s189, %s178
        $region28: #{tpu_custom_call.1} parent=19 // pred_fallthru
          _
      $region20: #{tpu_custom_call.1} parent=5 // pred_fallthru
        _
      %p192 = scmp.le.s32.totalorder 1, %s18
      %p193 = scmp.lt.s32.totalorder %s18, 3
      %p194 = pnand %p192, %p193
      %p195 = pneg %p194
      // Predicated region
      $region29: #{tpu_custom_call.1} parent=5 // pred_check
        _
      $region30: #{tpu_custom_call.1} parent=5 // pred_check_branch
        %197 = sbr.rel (%p194) target = $region32
      $region31: #{tpu_custom_call.1} parent=5 // pred_region
        %s198 = ssub.s32 %s18, 1
        %s199 = sand.u32 %s45, 1
        %s200 = scalar_lea.sflag [#allocation3], %s199
        %s201 = sand.u32 %s45, 1
        %s202 = smul.addr %s201, 8
        %s203 = scalar_lea.vmem [#allocation2], %s202
        // Predicated region
        $region33: #{tpu_custom_call.1} parent=31 // pred_check
          %p204 = pneg %p58
        $region34: #{tpu_custom_call.1} parent=31 // pred_check_branch
          %206 = sbr.rel (%p204) target = $region36
        $region35: #{tpu_custom_call.1} parent=31 // pred_region
          %207 = dma.done %s200, 128
        $region36: #{tpu_custom_call.1} parent=31 // pred_fallthru
          _
        %s208 = sand.u32 %s71, 1
        %s209 = scalar_lea.sflag [#allocation6], %s208
        %s210 = sand.u32 %s71, 1
        %s211 = smul.addr %s210, 8
        %s212 = scalar_lea.vmem [#allocation5], %s211
        // Predicated region
        $region37: #{tpu_custom_call.1} parent=31 // pred_check
          %p213 = pneg %p84
        $region38: #{tpu_custom_call.1} parent=31 // pred_check_branch
          %215 = sbr.rel (%p213) target = $region40
        $region39: #{tpu_custom_call.1} parent=31 // pred_region
          %216 = dma.done %s209, 128
        $region40: #{tpu_custom_call.1} parent=31 // pred_fallthru
          _
        %s217 = sand.u32 %s45, 1
        %s218 = scalar_lea.sflag [#allocation3], %s217
        %s219 = sand.u32 %s45, 1
        %s220 = smul.addr %s219, 8
        %s221 = scalar_lea.vmem [#allocation2], %s220
        %p222 = pneg %p58
        %p223 = pneg %p55
        %s224 = sand.u32 %s71, 1
        %s225 = scalar_lea.sflag [#allocation6], %s224
        %s226 = sand.u32 %s71, 1
        %s227 = smul.addr %s226, 8
        %s228 = scalar_lea.vmem [#allocation5], %s227
        %p229 = pneg %p84
        %p230 = pneg %p81
        %p231 = pneg %p105
        %p232 = pneg %p102
        %p233 = pneg %p133
        %p234 = pneg %p130
        %s235 = sand.u32 %s120, 1
        %s236 = scalar_lea.sflag [#allocation4], %s235
        %s237 = sand.u32 %s120, 1
        %s238 = smul.addr %s237, 8
        %s239 = scalar_lea.vmem [#allocation7], %s238
        %v240 = vld [vmem:[%s2] sm:$0x1]
        %v241 = vld [vmem:[%s2 + $0x1] sm:$0x1]
        %v242 = vld [vmem:[%s2 + $0x2] sm:$0x1]
        %v243 = vlaneseq
        %v244 = vand.u32 %v243, 127
        %vm245 = vcmp.lt.s32.totalorder %v244, 32
        %v246 = vsel %vm245, 1, 0
        %v247 = vcvt.s32.f32 %v246
        %v248 = vld [vmem:[%s203] sm:$0xff]
        %v249 = vld [vmem:[%s212] sm:$0xff]
        %v250 = vlaneseq
        %v251 = vshrl.u32 %v250, 7
        %v252 = vsub.s32 0, %v251
        %v253 = vrot.slane %v240, %v252
        %vm254 = vcmask 64512
        %v256 = vsel %vm254, %v248, 0
        %258 = vmatprep.subr.mxu0 0.0
        %259 = vmatpush1.msra.mxu0 %v249
        %260 = vmatprep.subr.mxu0 0.0
        %261 = vmatpush1.msra.mxu0 0.0
        %262 = vmatprep.subr.mxu0 0.0
        %263 = vmatpush1.msra.mxu0 0.0
        %264 = vmatprep.subr.mxu0 0.0
        %265 = vmatpush1.msra.mxu0 0.0
        %266 = vmatprep.subr.mxu0 0.0
        %267 = vmatpush1.msra.mxu0 0.0
        %268 = vmatprep.subr.mxu0 0.0
        %269 = vmatpush1.msra.mxu0 0.0
        %270 = vmatprep.subr.mxu0 0.0
        %271 = vmatpush1.msra.mxu0 0.0
        %272 = vmatprep.subr.mxu0 0.0
        %273 = vmatpush1.msra.mxu0 0.0
        %274 = vmatprep.subr.mxu0 0.0
        %275 = vmatpush1.msra.mxu0 0.0
        %276 = vmatprep.subr.mxu0 0.0
        %277 = vmatpush1.msra.mxu0 0.0
        %278 = vmatprep.subr.mxu0 0.0
        %279 = vmatpush1.msra.mxu0 0.0
        %280 = vmatprep.subr.mxu0 0.0
        %281 = vmatpush1.msra.mxu0 0.0
        %282 = vmatprep.subr.mxu0 0.0
        %283 = vmatpush1.msra.mxu0 0.0
        %284 = vmatprep.subr.mxu0 0.0
        %285 = vmatpush1.msra.mxu0 0.0
        %286 = vmatprep.subr.mxu0 0.0
        %287 = vmatpush1.msra.mxu0 0.0
        %288 = vmatprep.subr.mxu0 0.0
        %289 = vmatpush1.msra.mxu0 0.0
        %290 = vmatprep.subr.mxu0 0.0
        %291 = vmatpush1.msra.mxu0 0.0
        %292 = vmatprep.subr.mxu0 0.0
        %293 = vmatpush1.msra.mxu0 0.0
        %294 = vmatprep.subr.mxu0 0.0
        %295 = vmatpush1.msra.mxu0 0.0
        %296 = vmatprep.subr.mxu0 0.0
        %297 = vmatpush1.msra.mxu0 0.0
        %298 = vmatprep.subr.mxu0 0.0
        %299 = vmatpush1.msra.mxu0 0.0
        %300 = vmatprep.subr.mxu0 0.0
        %301 = vmatpush1.msra.mxu0 0.0
        %302 = vmatprep.subr.mxu0 0.0
        %303 = vmatpush1.msra.mxu0 0.0
        %304 = vmatprep.subr.mxu0 0.0
        %305 = vmatpush1.msra.mxu0 0.0
        %306 = vmatprep.subr.mxu0 0.0
        %307 = vmatpush1.msra.mxu0 0.0
        %308 = vmatprep.subr.mxu0 0.0
        %309 = vmatpush1.msra.mxu0 0.0
        %310 = vmatprep.subr.mxu0 0.0
        %311 = vmatpush1.msra.mxu0 0.0
        %312 = vmatprep.subr.mxu0 0.0
        %313 = vmatpush1.msra.mxu0 0.0
        %314 = vmatprep.subr.mxu0 0.0
        %315 = vmatpush1.msra.mxu0 0.0
        %316 = vmatprep.subr.mxu0 0.0
        %317 = vmatpush1.msra.mxu0 0.0
        %318 = vmatprep.subr.mxu0 0.0
        %319 = vmatpush1.msra.mxu0 0.0
        %320 = vmatprep.subr.mxu0 0.0
        %321 = vmatpush1.msra.mxu0 0.0
        %322 = vmatprep.mubr.f32.mxu0 0.0
        %323 = vmatmul.mubr.f32.gmra.mrb[0].mxu0 %v256
        %v324 = vpop.f32.mrb[0].mxu0
        %v325 = vadd.f32 %v253, %v324
        %v326 = vpop.f32.mrb[0].mxu0
        %327 = vdwg.mxu0
        %328 = vadd.xlane.f32.xlu0 %v325
        %v329 = vpop.xlane.xlu0 %328
        %v330 = vmul.f32 %v329, 0.03125
        %v331 = vsub.f32 %v325, %v330
        %v332 = vmul.f32 %v331, %v247
        %v333 = vmul.f32 %v332, %v332
        %334 = vadd.xlane.f32.xlu0 %v333
        %v335 = vpop.xlane.xlu0 %334
        %v336 = vmul.f32 %v335, 0.03125
        %v337 = vadd.f32 %v336, 1e-05
        %v338 = vrsqrt.pop %v337
        %v339 = vlaneseq
        %v340 = vshrl.u32 %v339, 7
        %v341 = vsub.s32 0, %v340
        %v342 = vrot.slane %v241, %v341
        %v343 = vmul.f32 %v338, %v342
        %v344 = vmul.f32 %v332, %v343
        %v345 = vlaneseq
        %v346 = vshrl.u32 %v345, 7
        %v347 = vsub.s32 0, %v346
        %v348 = vrot.slane %v242, %v347
        %v349 = vadd.f32 %v344, %v348
        %v350 = vmax.f32 %v349, 0.0
        %351 = vst [vmem:[%s239] sm:$0xff] %v350
        %s352 = sand.u32 %s120, 1
        %s353 = scalar_lea.sflag [#allocation4], %s352
        %s354 = sand.u32 %s120, 1
        %s355 = smul.addr %s354, 8
        %s356 = scalar_lea.vmem [#allocation7], %s355
        // Predicated region
        $region41: #{tpu_custom_call.1} parent=31 // pred_check
          %p357 = pneg %p130
        $region42: #{tpu_custom_call.1} parent=31 // pred_check_branch
          %359 = sbr.rel (%p357) target = $region44
        $region43: #{tpu_custom_call.1} parent=31 // pred_region
          %s361 = ssub.s32 128, 128
          %362 = vsyncadd %s353, %s361
          %s363 = sadd.s32 %s28, %s27
          %s364 = smul.addr %s363, 128
          %s365 = scalar_lea.hbm %s3, %s364
          %s367 = sshll.u32 %s356, 4
          %s368 = int_to_ptr.vmem [resolvable:$true] %s367
          %370 = dma.vmem_to_hbm [thread:$0]  %s368, 128, %s365, %s353
        $region44: #{tpu_custom_call.1} parent=31 // pred_fallthru
          _
      $region32: #{tpu_custom_call.1} parent=5 // pred_fallthru
        _
      %p371 = scmp.le.s32.totalorder 2, %s18
      // Predicated region
      $region45: #{tpu_custom_call.1} parent=5 // pred_check
        %p372 = pneg %p371
      $region46: #{tpu_custom_call.1} parent=5 // pred_check_branch
        %374 = sbr.rel (%p372) target = $region48
      $region47: #{tpu_custom_call.1} parent=5 // pred_region
        %s375 = ssub.s32 %s18, 2
        // Predicated region
        $region49: #{tpu_custom_call.1} parent=47 // pred_check
          %p376 = pneg %p136
        $region50: #{tpu_custom_call.1} parent=47 // pred_check_branch
          %378 = sbr.rel (%p376) target = $region52
        $region51: #{tpu_custom_call.1} parent=47 // pred_region
          %s379 = sand.u32 %s121, 1
          %s380 = scalar_lea.sflag [#allocation4], %s379
          %s381 = sand.u32 %s121, 1
          %s382 = smul.addr %s381, 8
          %s383 = scalar_lea.vmem [#allocation7], %s382
          %384 = dma.done %s380, 128
        $region52: #{tpu_custom_call.1} parent=47 // pred_fallthru
          _
      $region48: #{tpu_custom_call.1} parent=5 // pred_fallthru
        _
    $region6: #{tpu_custom_call.1} parent=1 // loop_footer
      %s22 = sadd.s32 1, %s18
    $region7: #{tpu_custom_call.1} parent=1 // loop_footer_branch
      %17 = sbr.rel target = $region3
    $region8: #{tpu_custom_call.1} parent=1 // loop_exit
      _
    %385 = vsyncpa [#allocation3], 1
    %s386 = scalar_lea.sflag [#allocation3], 1
    %387 = vsyncpa %s386, 1
    %388 = vsyncpa [#allocation6], 1
    %s389 = scalar_lea.sflag [#allocation6], 1
    %390 = vsyncpa %s389, 1
    %391 = vsyncpa [#allocation4], 1
    %s392 = scalar_lea.sflag [#allocation4], 1
    %393 = vsyncpa %s392, 1

</llo_original>
